<compile_context>
chip_gen: v7x
topology: tpu7x:2x2x1
jax: 0.10.0
libtpu: 0.0.40
codegen_flags: <defaults>
</compile_context>

<pallas_src>
import jax
import jax.numpy as jnp
from jax import lax
from jax.experimental import pallas as pl
from jax.experimental.pallas import tpu as pltpu  # noqa: F401  (TPU backend module)


def split_cat_kernel(x_ref, cat_ref):
    """split([1,1], dim=1) followed by cat(dim=1) is the identity: plain copy."""
    cat_ref[...] = x_ref[...]


def model_forward(x4):
    """Mirrors Model.forward. x4: (N, C=2, D, H, W)."""
    N, C, D, H, W = x4.shape
    assert C == 2, "module splits dim=1 into sizes [1, 1]"
    rest = D * H * W

    # Layout-preserving reshape (no transpose): rows = N*C, lanes = D*H*W.
    x2d = x4.reshape(N * C, rest)

    cat2d = pl.pallas_call(
        split_cat_kernel,
        out_shape=jax.ShapeDtypeStruct((N * C, rest), x4.dtype),
        input_output_aliases={0: 0},  # alias input -> cat output (identity op)
    )(x2d)

    concatenated = cat2d.reshape(N, C, D, H, W)

    # PyTorch `split` returns views of the input; slicing the (identity)
    # concatenated result in the wrapper reproduces that without extra kernel
    # outputs or HBM traffic.
    split0 = lax.slice_in_dim(concatenated, 0, 1, axis=1)
    split1 = lax.slice_in_dim(concatenated, 1, 2, axis=1)
    return concatenated, (split0, split1)


if __name__ == "__main__":
    key = jax.random.PRNGKey(0)
    x4 = jax.random.normal(key, (1, 2, 2, 2, 2), dtype=jnp.float32)

    concatenated, (s0, s1) = jax.jit(model_forward)(x4)
    jax.block_until_ready((concatenated, s0, s1))

    # Sanity checks against the reference semantics.
    assert concatenated.shape == (1, 2, 2, 2, 2)
    assert s0.shape == (1, 1, 2, 2, 2) and s1.shape == (1, 1, 2, 2, 2)
    assert jnp.allclose(concatenated, x4)                 # split + cat == identity
    assert jnp.allclose(s0, x4[:, 0:1]) and jnp.allclose(s1, x4[:, 1:2])

    print("KERNEL_OK")
</pallas_src>

<mosaic_0001>
module attributes {stable_mosaic.version = 11 : i64} {
  func.func @split_cat_kernel(%arg0: memref<2x8xf32, #tpu.memory_space<vmem>>, %arg1: memref<2x8xf32, #tpu.memory_space<vmem>>) attributes {dimension_semantics = [], scalar_prefetch = 0 : i64, scratch_operands = 0 : i64, tpu.core_type = #tpu.core_type<tc>} {
    %c0 = arith.constant 0 : index
    %c0_0 = arith.constant 0 : index
    %0 = vector.load %arg0[%c0, %c0_0] : memref<2x8xf32, #tpu.memory_space<vmem>>, vector<2x8xf32>
    %c0_1 = arith.constant 0 : index
    %c0_2 = arith.constant 0 : index
    %1 = vector.load %arg1[%c0_1, %c0_2] : memref<2x8xf32, #tpu.memory_space<vmem>>, vector<2x8xf32>
    tpu.vector_store %arg1[%c0_1, %c0_2], %0 {strides = array<i32>} : memref<2x8xf32, #tpu.memory_space<vmem>>, vector<2x8xf32>,
    return
  }
}

</mosaic_0001>

<llo_original>
// kernel: model_forward.1
$region0: #{model_forward.1}
  #allocation0 [shape = 'u32[]', space=smem, size = 0x4, offset = 0x4, fixed_abs, tag = 'smem constant byte address 0x4 - core index']
  #allocation1 [shape = 'u32[144,128]{1,0:T(1,128)}', space=vmem, size = 0x12000, scoped, tag = 'internal scratch']
  %s0 = inlined_call_operand.vmem [shape: f32[2,8], index: 0, kind: input, shape index: {}, may-alias: {0,1}]
  %s1 = inlined_call_operand.vmem [shape: f32[2,8], index: 1, kind: output, shape index: {}, may-alias: {0,1}]
  %s2 = sld [smem:[#allocation0]]
  $region14: #{model_forward.1} parent=0
    _
  %s4 = ssub.s32 1, %s2
  %s5 = scalar_select 0, %s4, %s2
  // Predicated region
  $region2: #{model_forward.1} parent=0 // pred_check
    _
  $region3: #{model_forward.1} parent=0 // pred_check_branch
    %7 = sbr.rel (0) target = $region5
  $region4: #{model_forward.1} parent=0 // pred_region
    _
  $region5: #{model_forward.1} parent=0 // pred_fallthru
    _
  %v8 = vld [vmem:[%s0] sm:$0x3]
  %vm9 = vcmask 58368
  %10 = vst.msk [vmem:[%s1] sm:$0x3] %vm9, %v8
  // Predicated region
  $region6: #{model_forward.1} parent=0 // pred_check
    _
  $region7: #{model_forward.1} parent=0 // pred_check_branch
    %12 = sbr.rel (0) target = $region9
  $region8: #{model_forward.1} parent=0 // pred_region
    _
  $region9: #{model_forward.1} parent=0 // pred_fallthru
    _
  // Predicated region
  $region10: #{model_forward.1} parent=0 // pred_check
    _
  $region11: #{model_forward.1} parent=0 // pred_check_branch
    %14 = sbr.rel (0) target = $region13
  $region12: #{model_forward.1} parent=0 // pred_region
    _
  $region13: #{model_forward.1} parent=0 // pred_fallthru
    _

</llo_original>
